<compile_context>
chip_gen: v5e
topology: v5e:2x2
jax: 0.10.0
libtpu: 0.0.40
codegen_flags: <defaults>
</compile_context>

<pallas_src>
import jax
import jax.numpy as jnp
from jax.experimental import pallas as pl
from jax.experimental.pallas import tpu as pltpu


def _ce_kernel(logits_ref, tgt_ref, loss_ref):
    # logits_ref: (1, C, TH, TW) any float dtype
    # tgt_ref:    (1, TH, TW) int32
    # loss_ref:   (1, TH, TW) float32
    num_classes = logits_ref.shape[1]
    t = tgt_ref[...]

    # Pass 1: running max over the class axis + target-logit "gather" via a
    # per-class equality mask.  C is a leading (untiled) block dim, so these
    # are elementwise VPU ops across per-class slabs.
    x0 = logits_ref[:, 0].astype(jnp.float32)
    m = x0
    picked = jnp.where(t == 0, x0, 0.0)
    for c in range(1, num_classes):
        xc = logits_ref[:, c].astype(jnp.float32)
        m = jnp.maximum(m, xc)
        picked = picked + jnp.where(t == c, xc, 0.0)

    # Pass 2: sum of exp(x - m) -- EUP work (one exp per class per pixel).
    s = jnp.zeros_like(m)
    for c in range(num_classes):
        xc = logits_ref[:, c].astype(jnp.float32)
        s = s + jnp.exp(xc - m)

    # Per-pixel cross-entropy: logsumexp(x) - x[target]
    loss_ref[...] = m + jnp.log(s) - picked


def _largest_tile(dim, unit, cap):
    """Largest multiple of `unit` that divides `dim` and is <= cap.

    Falls back to the full extent (always a legal Mosaic block dim) when `dim`
    is not a multiple of `unit` or no such divisor exists.
    """
    if dim % unit != 0:
        return dim
    cap = max(unit, min(int(cap), dim))
    t = (cap // unit) * unit
    while t >= unit:
        if dim % t == 0:
            return t
        t -= unit
    return dim


def _per_pixel_ce(logits_nchw, target_nhw, *, logits_block_budget_bytes=6 << 20):
    """Per-pixel cross entropy, NCHW in -> (N, H, W) f32 out."""
    N, C, H, W = logits_nchw.shape
    itemsize = jnp.dtype(logits_nchw.dtype).itemsize

    # Lane (W) tile: up to 512 lanes in 128-lane units, else full W extent.
    tw = _largest_tile(W, 128, 512)
    # Sublane (H) tile: as many rows as fit the per-block VMEM budget.
    max_rows = max(8, logits_block_budget_bytes // max(1, C * tw * itemsize))
    th = _largest_tile(H, 8, max_rows)

    grid = (N, H // th, W // tw)

    # Explicit scoped-VMEM limit: 2 pipeline buffers per array + margin,
    # capped at 64 MiB so the same config is safe on v7x.
    per_step_bytes = C * th * tw * itemsize + th * tw * 4 + th * tw * 4
    vmem_limit = int(min(64 << 20, max(32 << 20, 2 * per_step_bytes + (4 << 20))))

    return pl.pallas_call(
        _ce_kernel,
        out_shape=jax.ShapeDtypeStruct((N, H, W), jnp.float32),
        grid_spec=pltpu.PrefetchScalarGridSpec(
            num_scalar_prefetch=0,
            grid=grid,
            in_specs=[
                pl.BlockSpec((1, C, th, tw), lambda n, i, j: (n, 0, i, j)),
                pl.BlockSpec((1, th, tw), lambda n, i, j: (n, i, j)),
            ],
            out_specs=pl.BlockSpec((1, th, tw), lambda n, i, j: (n, i, j)),
        ),
        compiler_params=pltpu.CompilerParams(
            dimension_semantics=("parallel", "parallel", "parallel"),
            vmem_limit_bytes=vmem_limit,
        ),
    )(logits_nchw, target_nhw.astype(jnp.int32))


def bootstrapped_ce(logits_nchw, target_nhw, it,
                    start_warm=20000, end_warm=70000, top_p=0.15):
    """Mirrors BootstrappedCE.forward(input, target, it).

    `it` is a Python int (static), matching the PyTorch control flow.
    Returns (loss, this_p).
    """
    raw_loss = _per_pixel_ce(logits_nchw, target_nhw).reshape(-1)
    num_pixels = raw_loss.shape[0]

    if it < start_warm:
        return jnp.mean(raw_loss), 1.0

    if it > end_warm:
        this_p = top_p
    else:
        this_p = top_p + (1 - top_p) * ((end_warm - it) / (end_warm - start_warm))

    k = max(1, min(num_pixels, int(num_pixels * this_p)))
    # TODO(synk): exact global top-k stays as XLA glue (jax.lax.top_k) to keep
    # torch.topk semantics; swap to jax.lax.approx_max_k or a per-tile
    # candidate pass if the sort ever dominates wall time.
    topk_vals, _ = jax.lax.top_k(raw_loss, k)
    return jnp.mean(topk_vals), this_p


def _ref_per_pixel_ce(logits_nchw, target_nhw):
    # Pure-JAX reference for sanity checking.
    N, C, H, W = logits_nchw.shape
    x = jnp.transpose(logits_nchw, (0, 2, 3, 1)).reshape(-1, C).astype(jnp.float32)
    t = target_nhw.reshape(-1).astype(jnp.int32)
    logz = jax.scipy.special.logsumexp(x, axis=-1)
    picked = jnp.take_along_axis(x, t[:, None], axis=-1)[:, 0]
    return logz - picked


if __name__ == "__main__":
    key = jax.random.PRNGKey(0)
    k1, k2, k3, k4 = jax.random.split(key, 4)

    # Small NCHW shape consistent with the module.
    N, C, H, W = 2, 4, 16, 16
    logits = jax.random.normal(k1, (N, C, H, W), dtype=jnp.float32)
    target = jax.random.randint(k2, (N, H, W), 0, C, dtype=jnp.int32)

    # --- check per-pixel CE kernel against a pure-JAX reference ---
    raw = jax.block_until_ready(_per_pixel_ce(logits, target)).reshape(-1)
    raw_ref = _ref_per_pixel_ce(logits, target)
    assert jnp.allclose(raw, raw_ref, atol=1e-5, rtol=1e-5)

    # Second small shape exercising the lane-dense (W % 128 == 0) path.
    logits2 = jax.random.normal(k3, (1, 19, 8, 128), dtype=jnp.float32)
    target2 = jax.random.randint(k4, (1, 8, 128), 0, 19, dtype=jnp.int32)
    raw2 = jax.block_until_ready(_per_pixel_ce(logits2, target2)).reshape(-1)
    assert jnp.allclose(raw2, _ref_per_pixel_ce(logits2, target2),
                        atol=1e-5, rtol=1e-5)

    # --- warm-up branch (it < start_warm): plain mean cross-entropy ---
    loss_warm, p_warm = bootstrapped_ce(logits, target, it=100)
    loss_warm = jax.block_until_ready(loss_warm)

    # --- bootstrapped branch (start_warm <= it <= end_warm) ---
    loss_boot, p_boot = bootstrapped_ce(logits, target, it=30000)
    loss_boot = jax.block_until_ready(loss_boot)

    ref_warm = jnp.mean(raw_ref)
    this_p_ref = 0.15 + (1 - 0.15) * ((70000 - 30000) / (70000 - 20000))
    k = max(1, int(raw_ref.size * this_p_ref))
    ref_boot = jnp.mean(jax.lax.top_k(raw_ref, k)[0])

    assert p_warm == 1.0
    assert abs(p_boot - this_p_ref) < 1e-12
    assert jnp.allclose(loss_warm, ref_warm, atol=1e-5, rtol=1e-5)
    assert jnp.allclose(loss_boot, ref_boot, atol=1e-5, rtol=1e-5)

    print("KERNEL_OK")
</pallas_src>

<mosaic_0001>
module attributes {stable_mosaic.version = 11 : i64} {
  func.func @_ce_kernel(%arg0: i32, %arg1: i32, %arg2: i32, %arg3: memref<1x4x16x16xf32, #tpu.memory_space<vmem>>, %arg4: memref<1x16x16xi32, #tpu.memory_space<vmem>>, %arg5: memref<1x16x16xf32, #tpu.memory_space<vmem>>) attributes {dimension_semantics = [#tpu.dimension_semantics<parallel>, #tpu.dimension_semantics<parallel>, #tpu.dimension_semantics<parallel>], iteration_bounds = array<i64: 2, 1, 1>, scalar_prefetch = 0 : i64, scratch_operands = 0 : i64, tpu.core_type = #tpu.core_type<tc>, window_params = [{transform_indices = @transform_0, window_bounds = array<i64: 1, 4, 16, 16>}, {transform_indices = @transform_1, window_bounds = array<i64: 1, 16, 16>}, {transform_indices = @transform_2, window_bounds = array<i64: 1, 16, 16>}]} {
    %c0 = arith.constant 0 : index
    %c0_0 = arith.constant 0 : index
    %c0_1 = arith.constant 0 : index
    %0 = vector.load %arg4[%c0, %c0_0, %c0_1] : memref<1x16x16xi32, #tpu.memory_space<vmem>>, vector<1x16x16xi32>
    %c0_2 = arith.constant 0 : index
    %c0_3 = arith.constant 0 : index
    %c0_4 = arith.constant 0 : index
    %c0_5 = arith.constant 0 : index
    %1 = vector.load %arg3[%c0_2, %c0_3, %c0_4, %c0_5] : memref<1x4x16x16xf32, #tpu.memory_space<vmem>>, vector<1x1x16x16xf32>
    %2 = vector.shape_cast %1 : vector<1x1x16x16xf32> to vector<1x16x16xf32>
    %c0_i32 = arith.constant 0 : i32
    %3 = vector.broadcast %c0_i32 : i32 to vector<1x16x16xi32>
    %4 = arith.cmpi eq, %0, %3 : vector<1x16x16xi32>
    %cst = arith.constant 0.000000e+00 : f32
    %5 = vector.broadcast %cst : f32 to vector<1x16x16xf32>
    %6 = arith.select %4, %2, %5 : vector<1x16x16xi1>, vector<1x16x16xf32>
    %c0_6 = arith.constant 0 : index
    %c1 = arith.constant 1 : index
    %c0_7 = arith.constant 0 : index
    %c0_8 = arith.constant 0 : index
    %7 = vector.load %arg3[%c0_6, %c1, %c0_7, %c0_8] : memref<1x4x16x16xf32, #tpu.memory_space<vmem>>, vector<1x1x16x16xf32>
    %8 = vector.shape_cast %7 : vector<1x1x16x16xf32> to vector<1x16x16xf32>
    %9 = arith.maximumf %2, %8 : vector<1x16x16xf32>
    %c1_i32 = arith.constant 1 : i32
    %10 = vector.broadcast %c1_i32 : i32 to vector<1x16x16xi32>
    %11 = arith.cmpi eq, %0, %10 : vector<1x16x16xi32>
    %cst_9 = arith.constant 0.000000e+00 : f32
    %12 = vector.broadcast %cst_9 : f32 to vector<1x16x16xf32>
    %13 = arith.select %11, %8, %12 : vector<1x16x16xi1>, vector<1x16x16xf32>
    %14 = arith.addf %6, %13 : vector<1x16x16xf32>
    %c0_10 = arith.constant 0 : index
    %c2 = arith.constant 2 : index
    %c0_11 = arith.constant 0 : index
    %c0_12 = arith.constant 0 : index
    %15 = vector.load %arg3[%c0_10, %c2, %c0_11, %c0_12] : memref<1x4x16x16xf32, #tpu.memory_space<vmem>>, vector<1x1x16x16xf32>
    %16 = vector.shape_cast %15 : vector<1x1x16x16xf32> to vector<1x16x16xf32>
    %17 = arith.maximumf %9, %16 : vector<1x16x16xf32>
    %c2_i32 = arith.constant 2 : i32
    %18 = vector.broadcast %c2_i32 : i32 to vector<1x16x16xi32>
    %19 = arith.cmpi eq, %0, %18 : vector<1x16x16xi32>
    %cst_13 = arith.constant 0.000000e+00 : f32
    %20 = vector.broadcast %cst_13 : f32 to vector<1x16x16xf32>
    %21 = arith.select %19, %16, %20 : vector<1x16x16xi1>, vector<1x16x16xf32>
    %22 = arith.addf %14, %21 : vector<1x16x16xf32>
    %c0_14 = arith.constant 0 : index
    %c3 = arith.constant 3 : index
    %c0_15 = arith.constant 0 : index
    %c0_16 = arith.constant 0 : index
    %23 = vector.load %arg3[%c0_14, %c3, %c0_15, %c0_16] : memref<1x4x16x16xf32, #tpu.memory_space<vmem>>, vector<1x1x16x16xf32>
    %24 = vector.shape_cast %23 : vector<1x1x16x16xf32> to vector<1x16x16xf32>
    %25 = arith.maximumf %17, %24 : vector<1x16x16xf32>
    %c3_i32 = arith.constant 3 : i32
    %26 = vector.broadcast %c3_i32 : i32 to vector<1x16x16xi32>
    %27 = arith.cmpi eq, %0, %26 : vector<1x16x16xi32>
    %cst_17 = arith.constant 0.000000e+00 : f32
    %28 = vector.broadcast %cst_17 : f32 to vector<1x16x16xf32>
    %29 = arith.select %27, %24, %28 : vector<1x16x16xi1>, vector<1x16x16xf32>
    %30 = arith.addf %22, %29 : vector<1x16x16xf32>
    %cst_18 = arith.constant 0.000000e+00 : f32
    %31 = vector.broadcast %cst_18 : f32 to vector<1x16x16xf32>
    %c0_19 = arith.constant 0 : index
    %c0_20 = arith.constant 0 : index
    %c0_21 = arith.constant 0 : index
    %c0_22 = arith.constant 0 : index
    %32 = vector.load %arg3[%c0_19, %c0_20, %c0_21, %c0_22] : memref<1x4x16x16xf32, #tpu.memory_space<vmem>>, vector<1x1x16x16xf32>
    %33 = vector.shape_cast %32 : vector<1x1x16x16xf32> to vector<1x16x16xf32>
    %34 = arith.subf %33, %25 : vector<1x16x16xf32>
    %35 = math.exp %34 : vector<1x16x16xf32>
    %36 = arith.addf %31, %35 : vector<1x16x16xf32>
    %c0_23 = arith.constant 0 : index
    %c1_24 = arith.constant 1 : index
    %c0_25 = arith.constant 0 : index
    %c0_26 = arith.constant 0 : index
    %37 = vector.load %arg3[%c0_23, %c1_24, %c0_25, %c0_26] : memref<1x4x16x16xf32, #tpu.memory_space<vmem>>, vector<1x1x16x16xf32>
    %38 = vector.shape_cast %37 : vector<1x1x16x16xf32> to vector<1x16x16xf32>
    %39 = arith.subf %38, %25 : vector<1x16x16xf32>
    %40 = math.exp %39 : vector<1x16x16xf32>
    %41 = arith.addf %36, %40 : vector<1x16x16xf32>
    %c0_27 = arith.constant 0 : index
    %c2_28 = arith.constant 2 : index
    %c0_29 = arith.constant 0 : index
    %c0_30 = arith.constant 0 : index
    %42 = vector.load %arg3[%c0_27, %c2_28, %c0_29, %c0_30] : memref<1x4x16x16xf32, #tpu.memory_space<vmem>>, vector<1x1x16x16xf32>
    %43 = vector.shape_cast %42 : vector<1x1x16x16xf32> to vector<1x16x16xf32>
    %44 = arith.subf %43, %25 : vector<1x16x16xf32>
    %45 = math.exp %44 : vector<1x16x16xf32>
    %46 = arith.addf %41, %45 : vector<1x16x16xf32>
    %c0_31 = arith.constant 0 : index
    %c3_32 = arith.constant 3 : index
    %c0_33 = arith.constant 0 : index
    %c0_34 = arith.constant 0 : index
    %47 = vector.load %arg3[%c0_31, %c3_32, %c0_33, %c0_34] : memref<1x4x16x16xf32, #tpu.memory_space<vmem>>, vector<1x1x16x16xf32>
    %48 = vector.shape_cast %47 : vector<1x1x16x16xf32> to vector<1x16x16xf32>
    %49 = arith.subf %48, %25 : vector<1x16x16xf32>
    %50 = math.exp %49 : vector<1x16x16xf32>
    %51 = arith.addf %46, %50 : vector<1x16x16xf32>
    %52 = math.log %51 : vector<1x16x16xf32>
    %53 = arith.addf %25, %52 : vector<1x16x16xf32>
    %54 = arith.subf %53, %30 : vector<1x16x16xf32>
    %c0_35 = arith.constant 0 : index
    %c0_36 = arith.constant 0 : index
    %c0_37 = arith.constant 0 : index
    %55 = vector.load %arg5[%c0_35, %c0_36, %c0_37] : memref<1x16x16xf32, #tpu.memory_space<vmem>>, vector<1x16x16xf32>
    tpu.vector_store %arg5[%c0_35, %c0_36, %c0_37], %54 {strides = array<i32>} : memref<1x16x16xf32, #tpu.memory_space<vmem>>, vector<1x16x16xf32>,
    return
  }
  func.func @transform_0(%arg0: i32, %arg1: i32, %arg2: i32) -> (i32, i32, i32, i32) {
    %c0_i32 = arith.constant 0 : i32
    %c0_i32_0 = arith.constant 0 : i32
    return %arg0, %c0_i32, %arg1, %arg2 : i32, i32, i32, i32
  }
  func.func @transform_1(%arg0: i32, %arg1: i32, %arg2: i32) -> (i32, i32, i32) {
    %c0_i32 = arith.constant 0 : i32
    return %arg0, %arg1, %arg2 : i32, i32, i32
  }
  func.func @transform_2(%arg0: i32, %arg1: i32, %arg2: i32) -> (i32, i32, i32) {
    %c0_i32 = arith.constant 0 : i32
    return %arg0, %arg1, %arg2 : i32, i32, i32
  }
}

</mosaic_0001>

<llo_original>
// kernel: tpu_custom_call.1
$region0: #{tpu_custom_call.1}
  #allocation0 [shape = 'u32[]', space=smem, size = 0x4, offset = 0x4, fixed_abs, tag = 'smem constant byte address 0x4 - core index']
  #allocation1 [shape = 'u32[72,128]{1,0:T(1,128)}', space=vmem, size = 0x9000, scoped, tag = 'internal scratch']
  %s0 = inlined_call_operand.hbm [shape: f32[2,4,16,16], index: 0, kind: input, shape index: {}]
  %s1 = inlined_call_operand.hbm [shape: s32[2,16,16], index: 1, kind: input, shape index: {}]
  %s2 = inlined_call_operand.hbm [shape: f32[2,16,16], index: 2, kind: output, shape index: {}]
  %s3 = sld [smem:[#allocation0]]
  $region49: #{tpu_custom_call.1} parent=0
    _
  %s5 = ssub.s32 1, %s3
  %s6 = scalar_select 0, %s5, %s3
  $region1: #{tpu_custom_call.1} parent=0
    #allocation2 [shape = 'u8[65536]{0}', space=vmem, size = 0x10000, scoped, tag = 'input window, operand 0']
    #allocation3 [shape = 's32[2]{0}', space=sflag, size = 0x8, scoped, tag = 'scoped memory for tpu_custom_call.1']
    #allocation4 [shape = 's32[2]{0}', space=sflag, size = 0x8, scoped, tag = 'scoped memory for tpu_custom_call.1']
    #allocation5 [shape = 'u8[16384]{0}', space=vmem, size = 0x4000, scoped, tag = 'input window, operand 1']
    #allocation6 [shape = 's32[2]{0}', space=sflag, size = 0x8, scoped, tag = 'scoped memory for tpu_custom_call.1']
    #allocation7 [shape = 'u8[16384]{0}', space=vmem, size = 0x4000, scoped, tag = 'output window, operand 0']
    %7 = vsyncpa [#allocation3], 0
    %s8 = scalar_lea.sflag [#allocation3], 1
    %9 = vsyncpa %s8, 0
    %10 = vsyncpa [#allocation6], 0
    %s11 = scalar_lea.sflag [#allocation6], 1
    %12 = vsyncpa %s11, 0
    %13 = vsyncpa [#allocation4], 0
    %s14 = scalar_lea.sflag [#allocation4], 1
    %15 = vsyncpa %s14, 0
    loop: start=0, step=1, limit=4
    $region2: #{tpu_custom_call.1} parent=1 // loop_pre_header
      _
    $region3: #{tpu_custom_call.1} parent=1 // loop_header
      %s17 = sphi 0, %s21
      %p18 = scmp.ge.s32.totalorder %s17, 4
      %s24 = sphi 0, %s43
      %s25 = sphi 0, %s39
      %s26 = sphi 0, %s35
      %s27 = sphi 0, %s24
      %s28 = sphi 0, %s25
      %s29 = sphi 0, %s26
      %s30 = sphi 0, %s27
      %s31 = sphi 0, %s28
      %s32 = sphi 0, %s29
      %s50 = sphi 0, %s52
      %s53 = sphi 0, %s50
      %s54 = sphi 0, %s53
      %s70 = sphi 0, %s54
      %s80 = sphi 0, %s82
      %s83 = sphi 0, %s80
      %s84 = sphi 0, %s83
      %s100 = sphi 0, %s84
      %s110 = sphi 0, %s112
      %s113 = sphi 0, %s110
      %s114 = sphi 0, %s113
      %s130 = sphi 0, %s114
    $region4: #{tpu_custom_call.1} parent=1 // loop_header_branch
      %20 = sbr.rel (%p18) target = $region8
    $region5: #{tpu_custom_call.1} parent=1 // loop_body
      %s22 = ssub.s32 %s17, 1
      %s23 = ssub.s32 %s17, 2
      %s33 = sadd.s32 1, %s26
      %p34 = scmp.ge.s32.totalorder %s33, 1
      %s35 = scalar_select %p34, 0, %s33
      %s36 = sadd.s32 1, %s25
      %s37 = scalar_select %p34, %s36, %s25
      %p38 = scmp.ge.s32.totalorder %s37, 1
      %s39 = scalar_select %p38, 0, %s37
      %s40 = sadd.s32 1, %s24
      %s41 = scalar_select %p38, %s40, %s24
      %p42 = scmp.ge.s32.totalorder %s41, 2
      %s43 = scalar_select %p42, 0, %s41
      %s44 = ssub.s32 %s24, %s43
      %s45 = ssub.s32 %s25, %s39
      %s46 = sor.u32 %s44, %s45
      %s47 = ssub.s32 %s26, %s35
      %s48 = sor.u32 %s46, %s47
      %p49 = scmp.eq.s32.totalorder %s48, 0
      %s51 = sadd.s32 %s50, 1
      %s52 = scalar_select %p49, %s50, %s51
      %p55 = pneg %p49
      %p56 = scmp.eq.s32.totalorder %s17, 1
      %p57 = por %p55, %p56
      %p58 = scmp.ne.s32.totalorder %s50, %s53
      %p59 = scmp.eq.s32.totalorder %s17, 0
      %p60 = por %p58, %p59
      %p61 = scmp.ne.s32.totalorder %s50, %s53
      %p62 = scmp.eq.s32.totalorder %s22, 1
      %p63 = por %p61, %p62
      %p64 = scmp.ne.s32.totalorder %s53, %s54
      %p65 = scmp.eq.s32.totalorder %s22, 0
      %p66 = por %p64, %p65
      %p67 = scmp.ne.s32.totalorder %s53, %s54
      %p68 = scmp.eq.s32.totalorder %s23, 1
      %p69 = por %p67, %p68
      %p71 = scmp.ne.s32.totalorder %s54, %s70
      %p72 = scmp.eq.s32.totalorder %s23, 0
      %p73 = por %p71, %p72
      %s74 = ssub.s32 %s24, %s43
      %s75 = ssub.s32 %s25, %s39
      %s76 = sor.u32 %s74, %s75
      %s77 = ssub.s32 %s26, %s35
      %s78 = sor.u32 %s76, %s77
      %p79 = scmp.eq.s32.totalorder %s78, 0
      %s81 = sadd.s32 %s80, 1
      %s82 = scalar_select %p79, %s80, %s81
      %p85 = pneg %p79
      %p86 = scmp.eq.s32.totalorder %s17, 1
      %p87 = por %p85, %p86
      %p88 = scmp.ne.s32.totalorder %s80, %s83
      %p89 = scmp.eq.s32.totalorder %s17, 0
      %p90 = por %p88, %p89
      %p91 = scmp.ne.s32.totalorder %s80, %s83
      %p92 = scmp.eq.s32.totalorder %s22, 1
      %p93 = por %p91, %p92
      %p94 = scmp.ne.s32.totalorder %s83, %s84
      %p95 = scmp.eq.s32.totalorder %s22, 0
      %p96 = por %p94, %p95
      %p97 = scmp.ne.s32.totalorder %s83, %s84
      %p98 = scmp.eq.s32.totalorder %s23, 1
      %p99 = por %p97, %p98
      %p101 = scmp.ne.s32.totalorder %s84, %s100
      %p102 = scmp.eq.s32.totalorder %s23, 0
      %p103 = por %p101, %p102
      %s104 = ssub.s32 %s24, %s43
      %s105 = ssub.s32 %s25, %s39
      %s106 = sor.u32 %s104, %s105
      %s107 = ssub.s32 %s26, %s35
      %s108 = sor.u32 %s106, %s107
      %p109 = scmp.eq.s32.totalorder %s108, 0
      %s111 = sadd.s32 %s110, 1
      %s112 = scalar_select %p109, %s110, %s111
      %p115 = pneg %p109
      %p116 = scmp.eq.s32.totalorder %s17, 1
      %p117 = por %p115, %p116
      %p118 = scmp.ne.s32.totalorder %s110, %s113
      %p119 = scmp.eq.s32.totalorder %s17, 0
      %p120 = por %p118, %p119
      %p121 = scmp.ne.s32.totalorder %s110, %s113
      %p122 = scmp.eq.s32.totalorder %s22, 1
      %p123 = por %p121, %p122
      %p124 = scmp.ne.s32.totalorder %s113, %s114
      %p125 = scmp.eq.s32.totalorder %s22, 0
      %p126 = por %p124, %p125
      %p127 = scmp.ne.s32.totalorder %s113, %s114
      %p128 = scmp.eq.s32.totalorder %s23, 1
      %p129 = por %p127, %p128
      %p131 = scmp.ne.s32.totalorder %s114, %s130
      %p132 = scmp.eq.s32.totalorder %s23, 0
      %p133 = por %p131, %p132
      %p134 = scmp.le.s32.totalorder 1, %s17
      %p135 = scmp.lt.s32.totalorder %s17, 3
      %p136 = pnand %p134, %p135
      %p137 = pneg %p136
      // Predicated region
      $region9: #{tpu_custom_call.1} parent=5 // pred_check
        _
      $region10: #{tpu_custom_call.1} parent=5 // pred_check_branch
        %139 = sbr.rel (%p136) target = $region12
      $region11: #{tpu_custom_call.1} parent=5 // pred_region
        %s140 = ssub.s32 %s17, 1
      $region12: #{tpu_custom_call.1} parent=5 // pred_fallthru
        _
      %p141 = scmp.lt.s32.totalorder %s17, 2
      // Predicated region
      $region13: #{tpu_custom_call.1} parent=5 // pred_check
        %p142 = pneg %p141
      $region14: #{tpu_custom_call.1} parent=5 // pred_check_branch
        %144 = sbr.rel (%p142) target = $region16
      $region15: #{tpu_custom_call.1} parent=5 // pred_region
        // Predicated region
        $region17: #{tpu_custom_call.1} parent=15 // pred_check
          %p145 = pneg %p60
        $region18: #{tpu_custom_call.1} parent=15 // pred_check_branch
          %147 = sbr.rel (%p145) target = $region20
        $region19: #{tpu_custom_call.1} parent=15 // pred_region
          %s148 = sand.u32 %s50, 1
          %s149 = scalar_lea.sflag [#allocation3], %s148
          %s150 = sand.u32 %s50, 1
          %s151 = smul.addr %s150, 64
          %s152 = scalar_lea.vmem [#allocation2], %s151
          %s153 = smul.u32 2, %s25
          %155 = vsyncadd %s149, 0
          %s156 = sadd.s32 %s26, %s153
          %s157 = smul.addr %s24, 8
          %s158 = sadd.s32 %s156, %s157
          %s159 = smul.addr %s158, 8
          %s160 = scalar_lea.hbm %s0, %s159
          %s161 = sshll.u32 %s160, 4
          %s162 = int_to_ptr.hbm [resolvable:$true] %s161
          %s163 = sshll.u32 %s152, 4
          %s164 = int_to_ptr.vmem [resolvable:$true] %s163
          %169 = dma.hbm_to_vmem [thread:$0]  %s162, 1024, %s164, %s149, 128, 128, 8
        $region20: #{tpu_custom_call.1} parent=15 // pred_fallthru
          _
        // Predicated region
        $region21: #{tpu_custom_call.1} parent=15 // pred_check
          %p170 = pneg %p90
        $region22: #{tpu_custom_call.1} parent=15 // pred_check_branch
          %172 = sbr.rel (%p170) target = $region24
        $region23: #{tpu_custom_call.1} parent=15 // pred_region
          %s173 = sand.u32 %s80, 1
          %s174 = scalar_lea.sflag [#allocation6], %s173
          %s175 = sand.u32 %s80, 1
          %s176 = smul.addr %s175, 16
          %s177 = scalar_lea.vmem [#allocation5], %s176
          %s178 = smul.u32 2, %s25
          %180 = vsyncadd %s174, 0
          %s181 = sadd.s32 %s26, %s178
          %s182 = smul.addr %s24, 2
          %s183 = sadd.s32 %s181, %s182
          %s184 = smul.addr %s183, 8
          %s185 = scalar_lea.hbm %s1, %s184
          %s186 = sshll.u32 %s185, 4
          %s187 = int_to_ptr.hbm [resolvable:$true] %s186
          %s188 = sshll.u32 %s177, 4
          %s189 = int_to_ptr.vmem [resolvable:$true] %s188
          %194 = dma.hbm_to_vmem [thread:$0]  %s187, 256, %s189, %s174, 128, 128, 8
        $region24: #{tpu_custom_call.1} parent=15 // pred_fallthru
          _
      $region16: #{tpu_custom_call.1} parent=5 // pred_fallthru
        _
      %p195 = scmp.le.s32.totalorder 1, %s17
      %p196 = scmp.lt.s32.totalorder %s17, 3
      %p197 = pnand %p195, %p196
      %p198 = pneg %p197
      // Predicated region
      $region25: #{tpu_custom_call.1} parent=5 // pred_check
        _
      $region26: #{tpu_custom_call.1} parent=5 // pred_check_branch
        %200 = sbr.rel (%p197) target = $region28
      $region27: #{tpu_custom_call.1} parent=5 // pred_region
        %s201 = ssub.s32 %s17, 1
        %s202 = sand.u32 %s53, 1
        %s203 = scalar_lea.sflag [#allocation3], %s202
        %s204 = sand.u32 %s53, 1
        %s205 = smul.addr %s204, 64
        %s206 = scalar_lea.vmem [#allocation2], %s205
        // Predicated region
        $region29: #{tpu_custom_call.1} parent=27 // pred_check
          %p207 = pneg %p66
        $region30: #{tpu_custom_call.1} parent=27 // pred_check_branch
          %209 = sbr.rel (%p207) target = $region32
        $region31: #{tpu_custom_call.1} parent=27 // pred_region
          %211 = dma.done %s203, 1024
        $region32: #{tpu_custom_call.1} parent=27 // pred_fallthru
          _
        %s212 = sand.u32 %s83, 1
        %s213 = scalar_lea.sflag [#allocation6], %s212
        %s214 = sand.u32 %s83, 1
        %s215 = smul.addr %s214, 16
        %s216 = scalar_lea.vmem [#allocation5], %s215
        // Predicated region
        $region33: #{tpu_custom_call.1} parent=27 // pred_check
          %p217 = pneg %p96
        $region34: #{tpu_custom_call.1} parent=27 // pred_check_branch
          %219 = sbr.rel (%p217) target = $region36
        $region35: #{tpu_custom_call.1} parent=27 // pred_region
          %221 = dma.done %s213, 256
        $region36: #{tpu_custom_call.1} parent=27 // pred_fallthru
          _
        %s222 = sand.u32 %s53, 1
        %s223 = scalar_lea.sflag [#allocation3], %s222
        %s224 = sand.u32 %s53, 1
        %s225 = smul.addr %s224, 64
        %s226 = scalar_lea.vmem [#allocation2], %s225
        %p227 = pneg %p66
        %p228 = pneg %p63
        %s229 = sand.u32 %s83, 1
        %s230 = scalar_lea.sflag [#allocation6], %s229
        %s231 = sand.u32 %s83, 1
        %s232 = smul.addr %s231, 16
        %s233 = scalar_lea.vmem [#allocation5], %s232
        %p234 = pneg %p96
        %p235 = pneg %p93
        %p236 = pneg %p126
        %p237 = pneg %p123
        %s238 = sand.u32 %s113, 1
        %s239 = scalar_lea.sflag [#allocation4], %s238
        %s240 = sand.u32 %s113, 1
        %s241 = smul.addr %s240, 16
        %s242 = scalar_lea.vmem [#allocation7], %s241
        %s243 = smul.u32 2, %s28
        %s244 = smul.u32 2, %s28
        %s245 = smul.u32 2, %s28
        %v246 = vld [vmem:[%s216] sm:$0xff]
        %v247 = vld [vmem:[%s216 + $0x8] sm:$0xff]
        %v248 = vld [vmem:[%s206] sm:$0xff]
        %v249 = vld [vmem:[%s206 + $0x8] sm:$0xff]
        %vm250 = vcmp.eq.s32.totalorder %v246, 0
        %vm251 = vcmp.eq.s32.totalorder %v247, 0
        %v252 = vsel %vm250, %v248, 0.0
        %v253 = vsel %vm251, %v249, 0.0
        %s254 = scalar_lea.vmem %s206, 16 [#allocation2]
        %v255 = vld [vmem:[%s254] sm:$0xff]
        %v256 = vld [vmem:[%s254 + $0x8] sm:$0xff]
        %v257 = vmax.f32 %v248, %v255
        %v258 = vmax.f32 %v249, %v256
        %vm259 = vcmp.eq.s32.totalorder %v246, 1
        %vm260 = vcmp.eq.s32.totalorder %v247, 1
        %v261 = vsel %vm259, %v255, 0.0
        %v262 = vsel %vm260, %v256, 0.0
        %v263 = vadd.f32 %v252, %v261
        %v264 = vadd.f32 %v253, %v262
        %s265 = scalar_lea.vmem %s206, 32 [#allocation2]
        %v266 = vld [vmem:[%s265] sm:$0xff]
        %v267 = vld [vmem:[%s265 + $0x8] sm:$0xff]
        %v268 = vmax.f32 %v257, %v266
        %v269 = vmax.f32 %v258, %v267
        %vm270 = vcmp.eq.s32.totalorder %v246, 2
        %vm271 = vcmp.eq.s32.totalorder %v247, 2
        %v272 = vsel %vm270, %v266, 0.0
        %v273 = vsel %vm271, %v267, 0.0
        %v274 = vadd.f32 %v263, %v272
        %v275 = vadd.f32 %v264, %v273
        %s276 = scalar_lea.vmem %s206, 48 [#allocation2]
        %v277 = vld [vmem:[%s276] sm:$0xff]
        %v278 = vld [vmem:[%s276 + $0x8] sm:$0xff]
        %v279 = vmax.f32 %v268, %v277
        %v280 = vmax.f32 %v269, %v278
        %vm281 = vcmp.eq.s32.totalorder %v246, 3
        %vm282 = vcmp.eq.s32.totalorder %v247, 3
        %v283 = vsel %vm281, %v277, 0.0
        %v284 = vsel %vm282, %v278, 0.0
        %v285 = vadd.f32 %v274, %v283
        %v286 = vadd.f32 %v275, %v284
        %v287 = vsub.f32 %v248, %v279
        %v288 = vsub.f32 %v249, %v280
        %v289 = vmul.f32 %v287, 1.442695
        %v290 = vpow.pop %v289
        %v291 = vmul.f32 %v288, 1.442695
        %v292 = vpow.pop %v291
        %v293 = vadd.f32 %v290, 0.0
        %v294 = vadd.f32 %v292, 0.0
        %v295 = vsub.f32 %v255, %v279
        %v296 = vsub.f32 %v256, %v280
        %v297 = vmul.f32 %v295, 1.442695
        %v298 = vpow.pop %v297
        %v299 = vmul.f32 %v296, 1.442695
        %v300 = vpow.pop %v299
        %v301 = vadd.f32 %v293, %v298
        %v302 = vadd.f32 %v294, %v300
        %v303 = vsub.f32 %v266, %v279
        %v304 = vsub.f32 %v267, %v280
        %v305 = vmul.f32 %v303, 1.442695
        %v306 = vpow.pop %v305
        %v307 = vmul.f32 %v304, 1.442695
        %v308 = vpow.pop %v307
        %v309 = vadd.f32 %v301, %v306
        %v310 = vadd.f32 %v302, %v308
        %v311 = vsub.f32 %v277, %v279
        %v312 = vsub.f32 %v278, %v280
        %v313 = vmul.f32 %v311, 1.442695
        %v314 = vpow.pop %v313
        %v315 = vmul.f32 %v312, 1.442695
        %v316 = vpow.pop %v315
        %v317 = vadd.f32 %v309, %v314
        %v318 = vadd.f32 %v310, %v316
        %v319 = vlog2.pop %v317
        %v320 = vmul.f32 %v319, 0.6931472
        %v321 = vlog2.pop %v318
        %v322 = vmul.f32 %v321, 0.6931472
        %v323 = vadd.f32 %v279, %v320
        %v324 = vadd.f32 %v280, %v322
        %v325 = vsub.f32 %v323, %v285
        %v326 = vsub.f32 %v324, %v286
        %vm327 = vcmask 130048
        %328 = vst.msk [vmem:[%s242] sm:$0xff] %vm327, %v325
        %329 = vst.msk [vmem:[%s242 + $0x8] sm:$0xff] %vm327, %v326
        %s330 = sand.u32 %s113, 1
        %s331 = scalar_lea.sflag [#allocation4], %s330
        %s332 = sand.u32 %s113, 1
        %s333 = smul.addr %s332, 16
        %s334 = scalar_lea.vmem [#allocation7], %s333
        // Predicated region
        $region37: #{tpu_custom_call.1} parent=27 // pred_check
          %p335 = pneg %p123
        $region38: #{tpu_custom_call.1} parent=27 // pred_check_branch
          %337 = sbr.rel (%p335) target = $region40
        $region39: #{tpu_custom_call.1} parent=27 // pred_region
          %s338 = smul.u32 2, %s28
          %340 = vsyncadd %s331, 0
          %s341 = sadd.s32 %s29, %s338
          %s342 = smul.addr %s27, 2
          %s343 = sadd.s32 %s341, %s342
          %s344 = smul.addr %s343, 8
          %s345 = scalar_lea.hbm %s2, %s344
          %s346 = sshll.u32 %s334, 4
          %s347 = int_to_ptr.vmem [resolvable:$true] %s346
          %s348 = sshll.u32 %s345, 4
          %s349 = int_to_ptr.hbm [resolvable:$true] %s348
          %354 = dma.vmem_to_hbm [thread:$0]  %s347, 256, %s349, %s331, 128, 128, 8
        $region40: #{tpu_custom_call.1} parent=27 // pred_fallthru
          _
      $region28: #{tpu_custom_call.1} parent=5 // pred_fallthru
        _
      %p355 = scmp.le.s32.totalorder 2, %s17
      // Predicated region
      $region41: #{tpu_custom_call.1} parent=5 // pred_check
        %p356 = pneg %p355
      $region42: #{tpu_custom_call.1} parent=5 // pred_check_branch
        %358 = sbr.rel (%p356) target = $region44
      $region43: #{tpu_custom_call.1} parent=5 // pred_region
        %s359 = ssub.s32 %s17, 2
        // Predicated region
        $region45: #{tpu_custom_call.1} parent=43 // pred_check
          %p360 = pneg %p129
        $region46: #{tpu_custom_call.1} parent=43 // pred_check_branch
          %362 = sbr.rel (%p360) target = $region48
        $region47: #{tpu_custom_call.1} parent=43 // pred_region
          %s363 = sand.u32 %s114, 1
          %s364 = scalar_lea.sflag [#allocation4], %s363
          %s365 = sand.u32 %s114, 1
          %s366 = smul.addr %s365, 16
          %s367 = scalar_lea.vmem [#allocation7], %s366
          %369 = dma.done %s364, 256
        $region48: #{tpu_custom_call.1} parent=43 // pred_fallthru
          _
      $region44: #{tpu_custom_call.1} parent=5 // pred_fallthru
        _
    $region6: #{tpu_custom_call.1} parent=1 // loop_footer
      %s21 = sadd.s32 1, %s17
    $region7: #{tpu_custom_call.1} parent=1 // loop_footer_branch
      %16 = sbr.rel target = $region3
    $region8: #{tpu_custom_call.1} parent=1 // loop_exit
      _
    %370 = vsyncpa [#allocation3], 1
    %s371 = scalar_lea.sflag [#allocation3], 1
    %372 = vsyncpa %s371, 1
    %373 = vsyncpa [#allocation6], 1
    %s374 = scalar_lea.sflag [#allocation6], 1
    %375 = vsyncpa %s374, 1
    %376 = vsyncpa [#allocation4], 1
    %s377 = scalar_lea.sflag [#allocation4], 1
    %378 = vsyncpa %s377, 1

</llo_original>
